<compile_context>
chip_gen: v6e
topology: v6e:2x2x1
jax: 0.10.0
libtpu: 0.0.40
codegen_flags: <defaults>
</compile_context>

<pallas_src>
import jax
import jax.numpy as jnp
from jax.experimental import pallas as pl
from jax.experimental.pallas import tpu as pltpu

HIDDEN = 64          # logical hidden width of the module
HPAD = 128           # lane-padded hidden width used inside the kernel
NEG_SLOPE = 0.2


def _leaky_relu(x, slope=NEG_SLOPE):
    return jnp.where(x > 0, x, slope * x)


def _round_up(n, m):
    return ((n + m - 1) // m) * m


def _vmem_need_bytes(tm, size):
    """Rough per-step VMEM footprint for tile size tm (double-buffered)."""
    x_b = 2 * tm * size * 4                         # f32 x tile, 2 buffers
    o_b = 2 * tm * HPAD * 2                         # bf16 out tile, 2 buffers
    h_b = 2 * tm * HPAD * 4                         # f32 intermediates
    w_b = 2 * 2 * (size * HPAD + 2 * HPAD * HPAD)   # bf16 weights, 2 buffers
    return x_b + o_b + h_b + w_b


def _vmem_budget_and_phys():
    """Generation-aware VMEM: (tile budget, physical capacity)."""
    phys = 64 << 20                     # conservative fallback (v7x per-TC)
    try:
        cap = int(getattr(pltpu.get_tpu_info(), "vmem_capacity_bytes", 0) or 0)
        if cap > 0:
            phys = cap                  # 128 MiB on v5e/v6e, 64 MiB on v7x
    except Exception:
        pass
    budget = (phys * 3) // 4            # headroom for compiler scratch/sems
    return budget, phys


def _choose_tm(batch, size, budget):
    """Largest sublane-aligned batch tile whose footprint fits the budget."""
    tm = 2048
    while tm > 8 and _vmem_need_bytes(tm, size) > budget:
        tm //= 2
    return max(8, min(tm, _round_up(batch, 8)))


def toy_encoder_kernel(x_ref, w1_ref, b1_ref, w2_ref, b2_ref, w3_ref, b3_ref,
                       o_ref):
    # x tile arrives in its native dtype; cast to bf16 right before the MXU.
    x = x_ref[...].astype(jnp.bfloat16)

    h = jnp.dot(x, w1_ref[...], preferred_element_type=jnp.float32)
    h = _leaky_relu(h + b1_ref[...]).astype(jnp.bfloat16)

    h = jnp.dot(h, w2_ref[...], preferred_element_type=jnp.float32)
    h = _leaky_relu(h + b2_ref[...]).astype(jnp.bfloat16)

    h = jnp.dot(h, w3_ref[...], preferred_element_type=jnp.float32)
    h = _leaky_relu(h + b3_ref[...])

    o_ref[...] = h.astype(o_ref.dtype)   # lane-dense bf16 store (HPAD=128)


def pack_params(params):
    """Cast weights to bf16 and zero-pad hidden dims 64 -> 128 (done once)."""
    packed = []
    for idx, (w, b) in enumerate(params):
        fan_in, fan_out = w.shape
        in_pad = fan_in if idx == 0 else HPAD
        w_p = jnp.zeros((in_pad, HPAD), jnp.bfloat16)
        w_p = w_p.at[:fan_in, :fan_out].set(w.astype(jnp.bfloat16))
        b_p = jnp.zeros((1, HPAD), jnp.float32)
        b_p = b_p.at[:, :fan_out].set(b.astype(jnp.float32))
        packed.extend([w_p, b_p])
    return packed


def toy_encoder_forward(x, params, out_dtype=jnp.bfloat16):
    """x: any shape (B, ...); flattened to (B, size) like torch .view."""
    batch = x.shape[0]
    x2d = x.reshape(batch, -1)           # no dtype convert, no pad pass
    size = x2d.shape[1]

    budget, phys = _vmem_budget_and_phys()
    tm = _choose_tm(batch, size, budget)
    grid = (pl.cdiv(batch, tm),)         # ragged last block, writes masked

    need = _vmem_need_bytes(tm, size)
    vmem_limit = int(min(phys - (8 << 20), max(32 << 20, need + (8 << 20))))

    w1, b1, w2, b2, w3, b3 = pack_params(params)

    const = lambda i: (0, 0)
    out = pl.pallas_call(
        toy_encoder_kernel,
        out_shape=jax.ShapeDtypeStruct((batch, HPAD), out_dtype),
        grid_spec=pltpu.PrefetchScalarGridSpec(
            num_scalar_prefetch=0,
            grid=grid,
            in_specs=[
                pl.BlockSpec((tm, size), lambda i: (i, 0)),   # streamed x tile
                pl.BlockSpec((size, HPAD), const),            # W1 (resident)
                pl.BlockSpec((1, HPAD), const),               # b1
                pl.BlockSpec((HPAD, HPAD), const),            # W2
                pl.BlockSpec((1, HPAD), const),               # b2
                pl.BlockSpec((HPAD, HPAD), const),            # W3
                pl.BlockSpec((1, HPAD), const),               # b3
            ],
            out_specs=pl.BlockSpec((tm, HPAD), lambda i: (i, 0)),
        ),
        compiler_params=pltpu.CompilerParams(
            dimension_semantics=("parallel",),
            vmem_limit_bytes=vmem_limit,
        ),
    )(x2d, w1, b1, w2, b2, w3, b3)

    # Strip the lane-padding of the hidden dim (cheap view / fuses downstream).
    return out[:, :HIDDEN]


def init_params(key, size):
    """Deterministic parameter init mimicking nn.Linear default (uniform).

    Weights are stored (in_features, out_features) so the kernel computes
    y = x @ W + b (PyTorch stores W as (out, in); transposed here at init).
    """
    def linear(k, fan_in, fan_out):
        kw, kb = jax.random.split(k)
        bound = 1.0 / jnp.sqrt(fan_in)
        w = jax.random.uniform(kw, (fan_in, fan_out), jnp.float32, -bound, bound)
        b = jax.random.uniform(kb, (1, fan_out), jnp.float32, -bound, bound)
        return w, b

    k1, k2, k3 = jax.random.split(key, 3)
    return (
        linear(k1, size, HIDDEN),
        linear(k2, HIDDEN, HIDDEN),
        linear(k3, HIDDEN, HIDDEN),
    )


def reference_forward(x, params):
    """Pure-JAX reference mirroring the kernel's bf16-in / f32-accum math."""
    h = x.reshape(x.shape[0], -1).astype(jnp.bfloat16)
    for idx, (w, b) in enumerate(params):
        h = jnp.dot(h, w.astype(jnp.bfloat16),
                    preferred_element_type=jnp.float32) + b
        h = jnp.where(h > 0, h, NEG_SLOPE * h)
        if idx < len(params) - 1:
            h = h.astype(jnp.bfloat16)
    return h


if __name__ == "__main__":
    key = jax.random.PRNGKey(0)
    kx, kp = jax.random.split(key)

    # Small input: batch=2, channels=4, spatial=16x16 -> size = 1024 after view.
    x = jax.random.normal(kx, (2, 4, 16, 16), jnp.float32)
    size = 4 * 16 * 16

    params = init_params(kp, size)

    out = jax.block_until_ready(toy_encoder_forward(x, params))

    ref = reference_forward(x, params)
    assert out.shape == (2, HIDDEN)
    # Output is bf16 (one extra quantization vs the f32 reference accumulator).
    assert jnp.allclose(out.astype(jnp.float32), ref, atol=2e-2, rtol=2e-2), \
        "mismatch vs reference"

    print("KERNEL_OK")
</pallas_src>

<mosaic_0001>
module attributes {stable_mosaic.version = 11 : i64} {
  func.func @toy_encoder_kernel(%arg0: i32, %arg1: memref<8x1024xf32, #tpu.memory_space<vmem>>, %arg2: memref<1024x128xbf16, #tpu.memory_space<vmem>>, %arg3: memref<1x128xf32, #tpu.memory_space<vmem>>, %arg4: memref<128x128xbf16, #tpu.memory_space<vmem>>, %arg5: memref<1x128xf32, #tpu.memory_space<vmem>>, %arg6: memref<128x128xbf16, #tpu.memory_space<vmem>>, %arg7: memref<1x128xf32, #tpu.memory_space<vmem>>, %arg8: memref<8x128xbf16, #tpu.memory_space<vmem>>) attributes {dimension_semantics = [#tpu.dimension_semantics<parallel>], iteration_bounds = array<i64: 1>, scalar_prefetch = 0 : i64, scratch_operands = 0 : i64, tpu.core_type = #tpu.core_type<tc>, window_params = [{transform_indices = @transform_0, window_bounds = array<i64: 8, 1024>}, {pipeline_mode = #tpu.pipeline_mode<synchronous>, transform_indices = @transform_1, window_bounds = array<i64: 1024, 128>}, {pipeline_mode = #tpu.pipeline_mode<synchronous>, transform_indices = @transform_2, window_bounds = array<i64: 1, 128>}, {pipeline_mode = #tpu.pipeline_mode<synchronous>, transform_indices = @transform_3, window_bounds = array<i64: 128, 128>}, {pipeline_mode = #tpu.pipeline_mode<synchronous>, transform_indices = @transform_4, window_bounds = array<i64: 1, 128>}, {pipeline_mode = #tpu.pipeline_mode<synchronous>, transform_indices = @transform_5, window_bounds = array<i64: 128, 128>}, {pipeline_mode = #tpu.pipeline_mode<synchronous>, transform_indices = @transform_6, window_bounds = array<i64: 1, 128>}, {transform_indices = @transform_7, window_bounds = array<i64: 8, 128>}]} {
    %c0 = arith.constant 0 : index
    %c0_0 = arith.constant 0 : index
    %0 = vector.load %arg1[%c0, %c0_0] : memref<8x1024xf32, #tpu.memory_space<vmem>>, vector<8x1024xf32>
    %1 = arith.truncf %0 : vector<8x1024xf32> to vector<8x1024xbf16>
    %c0_1 = arith.constant 0 : index
    %c0_2 = arith.constant 0 : index
    %2 = vector.load %arg2[%c0_1, %c0_2] : memref<1024x128xbf16, #tpu.memory_space<vmem>>, vector<1024x128xbf16>
    %cst = arith.constant dense<0.000000e+00> : vector<8x128xf32>
    %3 = tpu.matmul %1, %2, %cst {dimension_numbers = #tpu.dot_dimension_numbers<[1], [0], [0], [1], [0, 0, 1, 1], [], []>} : vector<8x1024xbf16>, vector<1024x128xbf16>, vector<8x128xf32> -> vector<8x128xf32>
    %c0_3 = arith.constant 0 : index
    %c0_4 = arith.constant 0 : index
    %4 = vector.load %arg3[%c0_3, %c0_4] : memref<1x128xf32, #tpu.memory_space<vmem>>, vector<1x128xf32>
    %5 = vector.broadcast %4 : vector<1x128xf32> to vector<8x128xf32>
    %6 = arith.addf %3, %5 : vector<8x128xf32>
    %cst_5 = arith.constant 0.000000e+00 : f32
    %7 = vector.broadcast %cst_5 : f32 to vector<8x128xf32>
    %8 = arith.cmpf ogt, %6, %7 : vector<8x128xf32>
    %cst_6 = arith.constant 2.000000e-01 : f32
    %9 = vector.broadcast %cst_6 : f32 to vector<8x128xf32>
    %10 = arith.mulf %9, %6 : vector<8x128xf32>
    %11 = arith.select %8, %6, %10 : vector<8x128xi1>, vector<8x128xf32>
    %12 = arith.truncf %11 : vector<8x128xf32> to vector<8x128xbf16>
    %c0_7 = arith.constant 0 : index
    %c0_8 = arith.constant 0 : index
    %13 = vector.load %arg4[%c0_7, %c0_8] : memref<128x128xbf16, #tpu.memory_space<vmem>>, vector<128x128xbf16>
    %cst_9 = arith.constant dense<0.000000e+00> : vector<8x128xf32>
    %14 = tpu.matmul %12, %13, %cst_9 {dimension_numbers = #tpu.dot_dimension_numbers<[1], [0], [0], [1], [0, 0, 1, 1], [], []>} : vector<8x128xbf16>, vector<128x128xbf16>, vector<8x128xf32> -> vector<8x128xf32>
    %c0_10 = arith.constant 0 : index
    %c0_11 = arith.constant 0 : index
    %15 = vector.load %arg5[%c0_10, %c0_11] : memref<1x128xf32, #tpu.memory_space<vmem>>, vector<1x128xf32>
    %16 = vector.broadcast %15 : vector<1x128xf32> to vector<8x128xf32>
    %17 = arith.addf %14, %16 : vector<8x128xf32>
    %cst_12 = arith.constant 0.000000e+00 : f32
    %18 = vector.broadcast %cst_12 : f32 to vector<8x128xf32>
    %19 = arith.cmpf ogt, %17, %18 : vector<8x128xf32>
    %cst_13 = arith.constant 2.000000e-01 : f32
    %20 = vector.broadcast %cst_13 : f32 to vector<8x128xf32>
    %21 = arith.mulf %20, %17 : vector<8x128xf32>
    %22 = arith.select %19, %17, %21 : vector<8x128xi1>, vector<8x128xf32>
    %23 = arith.truncf %22 : vector<8x128xf32> to vector<8x128xbf16>
    %c0_14 = arith.constant 0 : index
    %c0_15 = arith.constant 0 : index
    %24 = vector.load %arg6[%c0_14, %c0_15] : memref<128x128xbf16, #tpu.memory_space<vmem>>, vector<128x128xbf16>
    %cst_16 = arith.constant dense<0.000000e+00> : vector<8x128xf32>
    %25 = tpu.matmul %23, %24, %cst_16 {dimension_numbers = #tpu.dot_dimension_numbers<[1], [0], [0], [1], [0, 0, 1, 1], [], []>} : vector<8x128xbf16>, vector<128x128xbf16>, vector<8x128xf32> -> vector<8x128xf32>
    %c0_17 = arith.constant 0 : index
    %c0_18 = arith.constant 0 : index
    %26 = vector.load %arg7[%c0_17, %c0_18] : memref<1x128xf32, #tpu.memory_space<vmem>>, vector<1x128xf32>
    %27 = vector.broadcast %26 : vector<1x128xf32> to vector<8x128xf32>
    %28 = arith.addf %25, %27 : vector<8x128xf32>
    %cst_19 = arith.constant 0.000000e+00 : f32
    %29 = vector.broadcast %cst_19 : f32 to vector<8x128xf32>
    %30 = arith.cmpf ogt, %28, %29 : vector<8x128xf32>
    %cst_20 = arith.constant 2.000000e-01 : f32
    %31 = vector.broadcast %cst_20 : f32 to vector<8x128xf32>
    %32 = arith.mulf %31, %28 : vector<8x128xf32>
    %33 = arith.select %30, %28, %32 : vector<8x128xi1>, vector<8x128xf32>
    %34 = arith.truncf %33 : vector<8x128xf32> to vector<8x128xbf16>
    %c0_21 = arith.constant 0 : index
    %c0_22 = arith.constant 0 : index
    %35 = vector.load %arg8[%c0_21, %c0_22] : memref<8x128xbf16, #tpu.memory_space<vmem>>, vector<8x128xbf16>
    tpu.vector_store %arg8[%c0_21, %c0_22], %34 {strides = array<i32>} : memref<8x128xbf16, #tpu.memory_space<vmem>>, vector<8x128xbf16>,
    return
  }
  func.func @transform_0(%arg0: i32) -> (i32, i32) {
    %c0_i32 = arith.constant 0 : i32
    %c0_i32_0 = arith.constant 0 : i32
    return %arg0, %c0_i32 : i32, i32
  }
  func.func @transform_1(%arg0: i32) -> (i32, i32) {
    %c0_i32 = arith.constant 0 : i32
    %c0_i32_0 = arith.constant 0 : i32
    %c0_i32_1 = arith.constant 0 : i32
    return %c0_i32, %c0_i32_0 : i32, i32
  }
  func.func @transform_2(%arg0: i32) -> (i32, i32) {
    %c0_i32 = arith.constant 0 : i32
    %c0_i32_0 = arith.constant 0 : i32
    %c0_i32_1 = arith.constant 0 : i32
    return %c0_i32, %c0_i32_0 : i32, i32
  }
  func.func @transform_3(%arg0: i32) -> (i32, i32) {
    %c0_i32 = arith.constant 0 : i32
    %c0_i32_0 = arith.constant 0 : i32
    %c0_i32_1 = arith.constant 0 : i32
    return %c0_i32, %c0_i32_0 : i32, i32
  }
  func.func @transform_4(%arg0: i32) -> (i32, i32) {
    %c0_i32 = arith.constant 0 : i32
    %c0_i32_0 = arith.constant 0 : i32
    %c0_i32_1 = arith.constant 0 : i32
    return %c0_i32, %c0_i32_0 : i32, i32
  }
  func.func @transform_5(%arg0: i32) -> (i32, i32) {
    %c0_i32 = arith.constant 0 : i32
    %c0_i32_0 = arith.constant 0 : i32
    %c0_i32_1 = arith.constant 0 : i32
    return %c0_i32, %c0_i32_0 : i32, i32
  }
  func.func @transform_6(%arg0: i32) -> (i32, i32) {
    %c0_i32 = arith.constant 0 : i32
    %c0_i32_0 = arith.constant 0 : i32
    %c0_i32_1 = arith.constant 0 : i32
    return %c0_i32, %c0_i32_0 : i32, i32
  }
  func.func @transform_7(%arg0: i32) -> (i32, i32) {
    %c0_i32 = arith.constant 0 : i32
    %c0_i32_0 = arith.constant 0 : i32
    return %arg0, %c0_i32 : i32, i32
  }
}

</mosaic_0001>

<llo_original>
// kernel: tpu_custom_call.1
$region0: #{tpu_custom_call.1}
  #allocation0 [shape = 'u32[]', space=smem, size = 0x4, offset = 0x4, fixed_abs, tag = 'smem constant byte address 0x4 - core index']
  #allocation1 [shape = 'u32[144,128]{1,0:T(1,128)}', space=vmem, size = 0x12000, scoped, tag = 'internal scratch']
  %s0 = inlined_call_operand.hbm [shape: f32[2,1024], index: 0, kind: input, shape index: {}]
  %s1 = inlined_call_operand.hbm [shape: bf16[1024,128], index: 1, kind: input, shape index: {}]
  %s2 = inlined_call_operand.vmem [shape: f32[1,128], index: 2, kind: input, shape index: {}]
  %s3 = inlined_call_operand.hbm [shape: bf16[128,128], index: 3, kind: input, shape index: {}]
  %s4 = inlined_call_operand.vmem [shape: f32[1,128], index: 4, kind: input, shape index: {}]
  %s5 = inlined_call_operand.hbm [shape: bf16[128,128], index: 5, kind: input, shape index: {}]
  %s6 = inlined_call_operand.vmem [shape: f32[1,128], index: 6, kind: input, shape index: {}]
  %s7 = inlined_call_operand.hbm [shape: bf16[2,128], index: 7, kind: output, shape index: {}]
  %s8 = sld [smem:[#allocation0]]
  $region54: #{tpu_custom_call.1} parent=0
    _
  %s10 = ssub.s32 1, %s8
  %s11 = scalar_select 0, %s10, %s8
  $region1: #{tpu_custom_call.1} parent=0
    #allocation2 [shape = 'u8[32768]{0}', space=vmem, size = 0x8000, scoped, tag = 'input window, operand 0, single buffered']
    #allocation3 [shape = 's32[1]{0}', space=sflag, size = 0x4, scoped, tag = 'scoped memory for tpu_custom_call.1']
    #allocation4 [shape = 's32[1]{0}', space=sflag, size = 0x4, scoped, tag = 'scoped memory for tpu_custom_call.1']
    #allocation5 [shape = 'u8[262144]{0}', space=vmem, size = 0x40000, scoped, tag = 'input window, operand 1, single buffered']
    #allocation6 [shape = 's32[1]{0}', space=sflag, size = 0x4, scoped, tag = 'scoped memory for tpu_custom_call.1']
    #allocation7 [shape = 'u8[32768]{0}', space=vmem, size = 0x8000, scoped, tag = 'input window, operand 3, single buffered']
    #allocation8 [shape = 'u8[32768]{0}', space=vmem, size = 0x8000, scoped, tag = 'input window, operand 5, single buffered']
    #allocation9 [shape = 's32[1]{0}', space=sflag, size = 0x4, scoped, tag = 'scoped memory for tpu_custom_call.1']
    #allocation10 [shape = 'u8[2048]{0}', space=vmem, size = 0x800, scoped, tag = 'output window, operand 0, single buffered']
    %12 = vsyncpa [#allocation3], 0
    %13 = vsyncpa [#allocation6], 0
    %14 = vsyncpa [#allocation9], 0
    %15 = vsyncpa [#allocation4], 0
    // Predicated region
    $region2: #{tpu_custom_call.1} parent=1 // pred_check
      _
    $region3: #{tpu_custom_call.1} parent=1 // pred_check_branch
      %17 = sbr.rel (0) target = $region5
    $region4: #{tpu_custom_call.1} parent=1 // pred_region
      %s19 = ssub.s32 1024, 256
      %20 = vsyncadd [#allocation3], %s19
      %s21 = sshll.u32 [#allocation2], 4
      %s22 = int_to_ptr.vmem [resolvable:$true] %s21
      %27 = dma.hbm_to_vmem [thread:$0]  %s0, 256, %s22, [#allocation3], 256, 256, 16
    $region5: #{tpu_custom_call.1} parent=1 // pred_fallthru
      _
    // Predicated region
    $region6: #{tpu_custom_call.1} parent=1 // pred_check
      _
    $region7: #{tpu_custom_call.1} parent=1 // pred_check_branch
      %29 = sbr.rel (0) target = $region9
    $region8: #{tpu_custom_call.1} parent=1 // pred_region
      %s31 = ssub.s32 8192, 8192
      %32 = vsyncadd [#allocation6], %s31
      %s33 = sshll.u32 [#allocation5], 4
      %s34 = int_to_ptr.vmem [resolvable:$true] %s33
      %39 = dma.hbm_to_vmem [thread:$0]  %s1, 8192, %s34, [#allocation6], 64, 64, 4
    $region9: #{tpu_custom_call.1} parent=1 // pred_fallthru
      _
    // Predicated region
    $region10: #{tpu_custom_call.1} parent=1 // pred_check
      _
    $region11: #{tpu_custom_call.1} parent=1 // pred_check_branch
      %41 = sbr.rel (0) target = $region13
    $region12: #{tpu_custom_call.1} parent=1 // pred_region
      _
    $region13: #{tpu_custom_call.1} parent=1 // pred_fallthru
      _
    // Predicated region
    $region14: #{tpu_custom_call.1} parent=1 // pred_check
      _
    $region15: #{tpu_custom_call.1} parent=1 // pred_check_branch
      %43 = sbr.rel (0) target = $region17
    $region16: #{tpu_custom_call.1} parent=1 // pred_region
      %s45 = ssub.s32 1024, 1024
      %46 = vsyncadd [#allocation6], %s45
      %s47 = sshll.u32 [#allocation7], 4
      %s48 = int_to_ptr.vmem [resolvable:$true] %s47
      %53 = dma.hbm_to_vmem [thread:$0]  %s3, 1024, %s48, [#allocation6], 64, 64, 4
    $region17: #{tpu_custom_call.1} parent=1 // pred_fallthru
      _
    // Predicated region
    $region18: #{tpu_custom_call.1} parent=1 // pred_check
      _
    $region19: #{tpu_custom_call.1} parent=1 // pred_check_branch
      %55 = sbr.rel (0) target = $region21
    $region20: #{tpu_custom_call.1} parent=1 // pred_region
      _
    $region21: #{tpu_custom_call.1} parent=1 // pred_fallthru
      _
    // Predicated region
    $region22: #{tpu_custom_call.1} parent=1 // pred_check
      _
    $region23: #{tpu_custom_call.1} parent=1 // pred_check_branch
      %57 = sbr.rel (0) target = $region25
    $region24: #{tpu_custom_call.1} parent=1 // pred_region
      %s59 = ssub.s32 1024, 1024
      %60 = vsyncadd [#allocation9], %s59
      %s61 = sshll.u32 [#allocation8], 4
      %s62 = int_to_ptr.vmem [resolvable:$true] %s61
      %67 = dma.hbm_to_vmem [thread:$0]  %s5, 1024, %s62, [#allocation9], 64, 64, 4
    $region25: #{tpu_custom_call.1} parent=1 // pred_fallthru
      _
    // Predicated region
    $region26: #{tpu_custom_call.1} parent=1 // pred_check
      _
    $region27: #{tpu_custom_call.1} parent=1 // pred_check_branch
      %69 = sbr.rel (0) target = $region29
    $region28: #{tpu_custom_call.1} parent=1 // pred_region
      _
    $region29: #{tpu_custom_call.1} parent=1 // pred_fallthru
      _
    // Predicated region
    $region30: #{tpu_custom_call.1} parent=1 // pred_check
      _
    $region31: #{tpu_custom_call.1} parent=1 // pred_check_branch
      %71 = sbr.rel (0) target = $region33
    $region32: #{tpu_custom_call.1} parent=1 // pred_region
      %72 = dma.done [#allocation3], 1024
    $region33: #{tpu_custom_call.1} parent=1 // pred_fallthru
      _
    // Predicated region
    $region34: #{tpu_custom_call.1} parent=1 // pred_check
      _
    $region35: #{tpu_custom_call.1} parent=1 // pred_check_branch
      %74 = sbr.rel (0) target = $region37
    $region36: #{tpu_custom_call.1} parent=1 // pred_region
      %75 = dma.done [#allocation6], 8192
    $region37: #{tpu_custom_call.1} parent=1 // pred_fallthru
      _
    // Predicated region
    $region38: #{tpu_custom_call.1} parent=1 // pred_check
      _
    $region39: #{tpu_custom_call.1} parent=1 // pred_check_branch
      %77 = sbr.rel (0) target = $region41
    $region40: #{tpu_custom_call.1} parent=1 // pred_region
      %78 = dma.done [#allocation6], 1024
    $region41: #{tpu_custom_call.1} parent=1 // pred_fallthru
      _
    // Predicated region
    $region42: #{tpu_custom_call.1} parent=1 // pred_check
      _
    $region43: #{tpu_custom_call.1} parent=1 // pred_check_branch
      %80 = sbr.rel (0) target = $region45
    $region44: #{tpu_custom_call.1} parent=1 // pred_region
      %81 = dma.done [#allocation9], 1024
    $region45: #{tpu_custom_call.1} parent=1 // pred_fallthru
      _
    %v83 = vld [vmem:[#allocation2] sm:$0xff]
    %v84 = vld [vmem:[#allocation2 + $0x8] sm:$0xff]
    %v85 = vld [vmem:[#allocation2 + $0x10] sm:$0xff]
    %v86 = vld [vmem:[#allocation2 + $0x18] sm:$0xff]
    %v87 = vld [vmem:[#allocation2 + $0x20] sm:$0xff]
    %v88 = vld [vmem:[#allocation2 + $0x28] sm:$0xff]
    %v89 = vld [vmem:[#allocation2 + $0x30] sm:$0xff]
    %v90 = vld [vmem:[#allocation2 + $0x38] sm:$0xff]
    %v99 = vcombine.low %v83, %v85
    %v100 = vcombine.high %v83, %v85
    %v101 = vcombine.low %v87, %v89
    %v102 = vcombine.high %v87, %v89
    %v104 = vunpack.c.l.s4 1983009808
    %v105 = vunpack.c.0.s8 %v104
    %v106 = vlaneseq
    %v107 = vshrl.u32 %v106, 7
    %v108 = vsub.s32 %v105, %v107
    %v109 = vrot.slane %v99, %v108
    %v111 = vunpack.c.l.s4 1983009808
    %v112 = vunpack.c.0.s8 %v111
    %v113 = vlaneseq
    %v114 = vshrl.u32 %v113, 7
    %v115 = vsub.s32 %v112, %v114
    %v116 = vrot.slane %v100, %v115
    %v118 = vunpack.c.l.s4 1983009808
    %v119 = vunpack.c.0.s8 %v118
    %v120 = vlaneseq
    %v121 = vshrl.u32 %v120, 7
    %v122 = vsub.s32 %v119, %v121
    %v123 = vrot.slane %v101, %v122
    %v125 = vunpack.c.l.s4 1983009808
    %v126 = vunpack.c.0.s8 %v125
    %v127 = vlaneseq
    %v128 = vshrl.u32 %v127, 7
    %v129 = vsub.s32 %v126, %v128
    %v130 = vrot.slane %v102, %v129
    %v131 = vcombine.low %v109, %v123
    %v132 = vcombine.high %v109, %v123
    %v133 = vcombine.low %v116, %v130
    %v134 = vcombine.high %v116, %v130
    %v135 = vcombine.low %v84, %v86
    %v136 = vcombine.high %v84, %v86
    %v137 = vcombine.low %v88, %v90
    %v138 = vcombine.high %v88, %v90
    %v140 = vunpack.c.l.s4 1983009808
    %v141 = vunpack.c.0.s8 %v140
    %v142 = vlaneseq
    %v143 = vshrl.u32 %v142, 7
    %v144 = vsub.s32 %v141, %v143
    %v145 = vrot.slane %v135, %v144
    %v147 = vunpack.c.l.s4 1983009808
    %v148 = vunpack.c.0.s8 %v147
    %v149 = vlaneseq
    %v150 = vshrl.u32 %v149, 7
    %v151 = vsub.s32 %v148, %v150
    %v152 = vrot.slane %v136, %v151
    %v154 = vunpack.c.l.s4 1983009808
    %v155 = vunpack.c.0.s8 %v154
    %v156 = vlaneseq
    %v157 = vshrl.u32 %v156, 7
    %v158 = vsub.s32 %v155, %v157
    %v159 = vrot.slane %v137, %v158
    %v161 = vunpack.c.l.s4 1983009808
    %v162 = vunpack.c.0.s8 %v161
    %v163 = vlaneseq
    %v164 = vshrl.u32 %v163, 7
    %v165 = vsub.s32 %v162, %v164
    %v166 = vrot.slane %v138, %v165
    %v167 = vcombine.low %v145, %v159
    %v168 = vcombine.high %v145, %v159
    %v169 = vcombine.low %v152, %v166
    %v170 = vcombine.high %v152, %v166
    %v179 = vpack.c.bf16 %v131, %v131
    %v180 = vpack.c.bf16 %v132, %v132
    %v181 = vpack.c.bf16 %v133, %v133
    %v182 = vpack.c.bf16 %v134, %v134
    %v183 = vpack.c.bf16 %v167, %v167
    %v184 = vpack.c.bf16 %v168, %v168
    %v185 = vpack.c.bf16 %v169, %v169
    %v186 = vpack.c.bf16 %v170, %v170
    %v187 = vld [vmem:[#allocation5] sm:$0xf]
    %v188 = vld [vmem:[#allocation5 + $0x4] sm:$0xf]
    %v189 = vld [vmem:[#allocation5 + $0x8] sm:$0xf]
    %v190 = vld [vmem:[#allocation5 + $0xc] sm:$0xf]
    %v191 = vld [vmem:[#allocation5 + $0x10] sm:$0xf]
    %v192 = vld [vmem:[#allocation5 + $0x14] sm:$0xf]
    %v193 = vld [vmem:[#allocation5 + $0x18] sm:$0xf]
    %v194 = vld [vmem:[#allocation5 + $0x1c] sm:$0xf]
    %v195 = vld [vmem:[#allocation5 + $0x20] sm:$0xf]
    %v196 = vld [vmem:[#allocation5 + $0x24] sm:$0xf]
    %v197 = vld [vmem:[#allocation5 + $0x28] sm:$0xf]
    %v198 = vld [vmem:[#allocation5 + $0x2c] sm:$0xf]
    %v199 = vld [vmem:[#allocation5 + $0x30] sm:$0xf]
    %v200 = vld [vmem:[#allocation5 + $0x34] sm:$0xf]
    %v201 = vld [vmem:[#allocation5 + $0x38] sm:$0xf]
    %v202 = vld [vmem:[#allocation5 + $0x3c] sm:$0xf]
    %v203 = vld [vmem:[#allocation5 + $0x40] sm:$0xf]
    %v204 = vld [vmem:[#allocation5 + $0x44] sm:$0xf]
    %v205 = vld [vmem:[#allocation5 + $0x48] sm:$0xf]
    %v206 = vld [vmem:[#allocation5 + $0x4c] sm:$0xf]
    %v207 = vld [vmem:[#allocation5 + $0x50] sm:$0xf]
    %v208 = vld [vmem:[#allocation5 + $0x54] sm:$0xf]
    %v209 = vld [vmem:[#allocation5 + $0x58] sm:$0xf]
    %v210 = vld [vmem:[#allocation5 + $0x5c] sm:$0xf]
    %v211 = vld [vmem:[#allocation5 + $0x60] sm:$0xf]
    %v212 = vld [vmem:[#allocation5 + $0x64] sm:$0xf]
    %v213 = vld [vmem:[#allocation5 + $0x68] sm:$0xf]
    %v214 = vld [vmem:[#allocation5 + $0x6c] sm:$0xf]
    %v215 = vld [vmem:[#allocation5 + $0x70] sm:$0xf]
    %v216 = vld [vmem:[#allocation5 + $0x74] sm:$0xf]
    %v217 = vld [vmem:[#allocation5 + $0x78] sm:$0xf]
    %v218 = vld [vmem:[#allocation5 + $0x7c] sm:$0xf]
    %v219 = vld [vmem:[#allocation5 + $0x80] sm:$0xf]
    %v220 = vld [vmem:[#allocation5 + $0x84] sm:$0xf]
    %v221 = vld [vmem:[#allocation5 + $0x88] sm:$0xf]
    %v222 = vld [vmem:[#allocation5 + $0x8c] sm:$0xf]
    %v223 = vld [vmem:[#allocation5 + $0x90] sm:$0xf]
    %v224 = vld [vmem:[#allocation5 + $0x94] sm:$0xf]
    %v225 = vld [vmem:[#allocation5 + $0x98] sm:$0xf]
    %v226 = vld [vmem:[#allocation5 + $0x9c] sm:$0xf]
    %v227 = vld [vmem:[#allocation5 + $0xa0] sm:$0xf]
    %v228 = vld [vmem:[#allocation5 + $0xa4] sm:$0xf]
    %v229 = vld [vmem:[#allocation5 + $0xa8] sm:$0xf]
    %v230 = vld [vmem:[#allocation5 + $0xac] sm:$0xf]
    %v231 = vld [vmem:[#allocation5 + $0xb0] sm:$0xf]
    %v232 = vld [vmem:[#allocation5 + $0xb4] sm:$0xf]
    %v233 = vld [vmem:[#allocation5 + $0xb8] sm:$0xf]
    %v234 = vld [vmem:[#allocation5 + $0xbc] sm:$0xf]
    %v235 = vld [vmem:[#allocation5 + $0xc0] sm:$0xf]
    %v236 = vld [vmem:[#allocation5 + $0xc4] sm:$0xf]
    %v237 = vld [vmem:[#allocation5 + $0xc8] sm:$0xf]
    %v238 = vld [vmem:[#allocation5 + $0xcc] sm:$0xf]
    %v239 = vld [vmem:[#allocation5 + $0xd0] sm:$0xf]
    %v240 = vld [vmem:[#allocation5 + $0xd4] sm:$0xf]
    %v241 = vld [vmem:[#allocation5 + $0xd8] sm:$0xf]
    %v242 = vld [vmem:[#allocation5 + $0xdc] sm:$0xf]
    %v243 = vld [vmem:[#allocation5 + $0xe0] sm:$0xf]
    %v244 = vld [vmem:[#allocation5 + $0xe4] sm:$0xf]
    %v245 = vld [vmem:[#allocation5 + $0xe8] sm:$0xf]
    %v246 = vld [vmem:[#allocation5 + $0xec] sm:$0xf]
    %v247 = vld [vmem:[#allocation5 + $0xf0] sm:$0xf]
    %v248 = vld [vmem:[#allocation5 + $0xf4] sm:$0xf]
    %v249 = vld [vmem:[#allocation5 + $0xf8] sm:$0xf]
    %v250 = vld [vmem:[#allocation5 + $0xfc] sm:$0xf]
    %v251 = vld [vmem:[#allocation5 + $0x100] sm:$0xf]
    %v252 = vld [vmem:[#allocation5 + $0x104] sm:$0xf]
    %v253 = vld [vmem:[#allocation5 + $0x108] sm:$0xf]
    %v254 = vld [vmem:[#allocation5 + $0x10c] sm:$0xf]
    %v255 = vld [vmem:[#allocation5 + $0x110] sm:$0xf]
    %v256 = vld [vmem:[#allocation5 + $0x114] sm:$0xf]
    %v257 = vld [vmem:[#allocation5 + $0x118] sm:$0xf]
    %v258 = vld [vmem:[#allocation5 + $0x11c] sm:$0xf]
    %v259 = vld [vmem:[#allocation5 + $0x120] sm:$0xf]
    %v260 = vld [vmem:[#allocation5 + $0x124] sm:$0xf]
    %v261 = vld [vmem:[#allocation5 + $0x128] sm:$0xf]
    %v262 = vld [vmem:[#allocation5 + $0x12c] sm:$0xf]
    %v263 = vld [vmem:[#allocation5 + $0x130] sm:$0xf]
    %v264 = vld [vmem:[#allocation5 + $0x134] sm:$0xf]
    %v265 = vld [vmem:[#allocation5 + $0x138] sm:$0xf]
    %v266 = vld [vmem:[#allocation5 + $0x13c] sm:$0xf]
    %v267 = vld [vmem:[#allocation5 + $0x140] sm:$0xf]
    %v268 = vld [vmem:[#allocation5 + $0x144] sm:$0xf]
    %v269 = vld [vmem:[#allocation5 + $0x148] sm:$0xf]
    %v270 = vld [vmem:[#allocation5 + $0x14c] sm:$0xf]
    %v271 = vld [vmem:[#allocation5 + $0x150] sm:$0xf]
    %v272 = vld [vmem:[#allocation5 + $0x154] sm:$0xf]
    %v273 = vld [vmem:[#allocation5 + $0x158] sm:$0xf]
    %v274 = vld [vmem:[#allocation5 + $0x15c] sm:$0xf]
    %v275 = vld [vmem:[#allocation5 + $0x160] sm:$0xf]
    %v276 = vld [vmem:[#allocation5 + $0x164] sm:$0xf]
    %v277 = vld [vmem:[#allocation5 + $0x168] sm:$0xf]
    %v278 = vld [vmem:[#allocation5 + $0x16c] sm:$0xf]
    %v279 = vld [vmem:[#allocation5 + $0x170] sm:$0xf]
    %v280 = vld [vmem:[#allocation5 + $0x174] sm:$0xf]
    %v281 = vld [vmem:[#allocation5 + $0x178] sm:$0xf]
    %v282 = vld [vmem:[#allocation5 + $0x17c] sm:$0xf]
    %v283 = vld [vmem:[#allocation5 + $0x180] sm:$0xf]
    %v284 = vld [vmem:[#allocation5 + $0x184] sm:$0xf]
    %v285 = vld [vmem:[#allocation5 + $0x188] sm:$0xf]
    %v286 = vld [vmem:[#allocation5 + $0x18c] sm:$0xf]
    %v287 = vld [vmem:[#allocation5 + $0x190] sm:$0xf]
    %v288 = vld [vmem:[#allocation5 + $0x194] sm:$0xf]
    %v289 = vld [vmem:[#allocation5 + $0x198] sm:$0xf]
    %v290 = vld [vmem:[#allocation5 + $0x19c] sm:$0xf]
    %v291 = vld [vmem:[#allocation5 + $0x1a0] sm:$0xf]
    %v292 = vld [vmem:[#allocation5 + $0x1a4] sm:$0xf]
    %v293 = vld [vmem:[#allocation5 + $0x1a8] sm:$0xf]
    %v294 = vld [vmem:[#allocation5 + $0x1ac] sm:$0xf]
    %v295 = vld [vmem:[#allocation5 + $0x1b0] sm:$0xf]
    %v296 = vld [vmem:[#allocation5 + $0x1b4] sm:$0xf]
    %v297 = vld [vmem:[#allocation5 + $0x1b8] sm:$0xf]
    %v298 = vld [vmem:[#allocation5 + $0x1bc] sm:$0xf]
    %v299 = vld [vmem:[#allocation5 + $0x1c0] sm:$0xf]
    %v300 = vld [vmem:[#allocation5 + $0x1c4] sm:$0xf]
    %v301 = vld [vmem:[#allocation5 + $0x1c8] sm:$0xf]
    %v302 = vld [vmem:[#allocation5 + $0x1cc] sm:$0xf]
    %v303 = vld [vmem:[#allocation5 + $0x1d0] sm:$0xf]
    %v304 = vld [vmem:[#allocation5 + $0x1d4] sm:$0xf]
    %v305 = vld [vmem:[#allocation5 + $0x1d8] sm:$0xf]
    %v306 = vld [vmem:[#allocation5 + $0x1dc] sm:$0xf]
    %v307 = vld [vmem:[#allocation5 + $0x1e0] sm:$0xf]
    %v308 = vld [vmem:[#allocation5 + $0x1e4] sm:$0xf]
    %v309 = vld [vmem:[#allocation5 + $0x1e8] sm:$0xf]
    %v310 = vld [vmem:[#allocation5 + $0x1ec] sm:$0xf]
    %v311 = vld [vmem:[#allocation5 + $0x1f0] sm:$0xf]
    %v312 = vld [vmem:[#allocation5 + $0x1f4] sm:$0xf]
    %v313 = vld [vmem:[#allocation5 + $0x1f8] sm:$0xf]
    %v314 = vld [vmem:[#allocation5 + $0x1fc] sm:$0xf]
    %v315 = vld [vmem:[%s2] sm:$0x1]
    %v317 = vlaneseq
    %v318 = vshrl.u32 %v317, 7
    %v319 = vsub.s32 0, %v318
    %v320 = vrot.slane %v315, %v319
    %v450 = vunpack.c.l.b16 %v187
    %v451 = vunpack.c.l.b16 %v188
    %v452 = vunpack.c.l.b16 %v189
    %v453 = vunpack.c.l.b16 %v190
    %v454 = vunpack.c.l.b16 %v191
    %v455 = vunpack.c.l.b16 %v192
    %v456 = vunpack.c.l.b16 %v193
    %v457 = vunpack.c.l.b16 %v194
    %v458 = vunpack.c.l.b16 %v195
    %v459 = vunpack.c.l.b16 %v196
    %v460 = vunpack.c.l.b16 %v197
    %v461 = vunpack.c.l.b16 %v198
    %v462 = vunpack.c.l.b16 %v199
    %v463 = vunpack.c.l.b16 %v200
    %v464 = vunpack.c.l.b16 %v201
    %v465 = vunpack.c.l.b16 %v202
    %v466 = vunpack.c.l.b16 %v203
    %v467 = vunpack.c.l.b16 %v204
    %v468 = vunpack.c.l.b16 %v205
    %v469 = vunpack.c.l.b16 %v206
    %v470 = vunpack.c.l.b16 %v207
    %v471 = vunpack.c.l.b16 %v208
    %v472 = vunpack.c.l.b16 %v209
    %v473 = vunpack.c.l.b16 %v210
    %v474 = vunpack.c.l.b16 %v211
    %v475 = vunpack.c.l.b16 %v212
    %v476 = vunpack.c.l.b16 %v213
    %v477 = vunpack.c.l.b16 %v214
    %v478 = vunpack.c.l.b16 %v215
    %v479 = vunpack.c.l.b16 %v216
    %v480 = vunpack.c.l.b16 %v217
    %v481 = vunpack.c.l.b16 %v218
    %v482 = vunpack.c.l.b16 %v219
    %v483 = vunpack.c.l.b16 %v220
    %v484 = vunpack.c.l.b16 %v221
    %v485 = vunpack.c.l.b16 %v222
    %v486 = vunpack.c.l.b16 %v223
    %v487 = vunpack.c.l.b16 %v224
    %v488 = vunpack.c.l.b16 %v225
    %v489 = vunpack.c.l.b16 %v226
    %v490 = vunpack.c.l.b16 %v227
    %v491 = vunpack.c.l.b16 %v228
    %v492 = vunpack.c.l.b16 %v229
    %v493 = vunpack.c.l.b16 %v230
    %v494 = vunpack.c.l.b16 %v231
    %v495 = vunpack.c.l.b16 %v232
    %v496 = vunpack.c.l.b16 %v233
    %v497 = vunpack.c.l.b16 %v234
    %v498 = vunpack.c.l.b16 %v235
    %v499 = vunpack.c.l.b16 %v236
    %v500 = vunpack.c.l.b16 %v237
    %v501 = vunpack.c.l.b16 %v238
    %v502 = vunpack.c.l.b16 %v239
    %v503 = vunpack.c.l.b16 %v240
    %v504 = vunpack.c.l.b16 %v241
    %v505 = vunpack.c.l.b16 %v242
    %v506 = vunpack.c.l.b16 %v243
    %v507 = vunpack.c.l.b16 %v244
    %v508 = vunpack.c.l.b16 %v245
    %v509 = vunpack.c.l.b16 %v246
    %v510 = vunpack.c.l.b16 %v247
    %v511 = vunpack.c.l.b16 %v248
    %v512 = vunpack.c.l.b16 %v249
    %v513 = vunpack.c.l.b16 %v250
    %v514 = vunpack.c.l.b16 %v251
    %v515 = vunpack.c.l.b16 %v252
    %v516 = vunpack.c.l.b16 %v253
    %v517 = vunpack.c.l.b16 %v254
    %v518 = vunpack.c.l.b16 %v255
    %v519 = vunpack.c.l.b16 %v256
    %v520 = vunpack.c.l.b16 %v257
    %v521 = vunpack.c.l.b16 %v258
    %v522 = vunpack.c.l.b16 %v259
    %v523 = vunpack.c.l.b16 %v260
    %v524 = vunpack.c.l.b16 %v261
    %v525 = vunpack.c.l.b16 %v262
    %v526 = vunpack.c.l.b16 %v263
    %v527 = vunpack.c.l.b16 %v264
    %v528 = vunpack.c.l.b16 %v265
    %v529 = vunpack.c.l.b16 %v266
    %v530 = vunpack.c.l.b16 %v267
    %v531 = vunpack.c.l.b16 %v268
    %v532 = vunpack.c.l.b16 %v269
    %v533 = vunpack.c.l.b16 %v270
    %v534 = vunpack.c.l.b16 %v271
    %v535 = vunpack.c.l.b16 %v272
    %v536 = vunpack.c.l.b16 %v273
    %v537 = vunpack.c.l.b16 %v274
    %v538 = vunpack.c.l.b16 %v275
    %v539 = vunpack.c.l.b16 %v276
    %v540 = vunpack.c.l.b16 %v277
    %v541 = vunpack.c.l.b16 %v278
    %v542 = vunpack.c.l.b16 %v279
    %v543 = vunpack.c.l.b16 %v280
    %v544 = vunpack.c.l.b16 %v281
    %v545 = vunpack.c.l.b16 %v282
    %v546 = vunpack.c.l.b16 %v283
    %v547 = vunpack.c.l.b16 %v284
    %v548 = vunpack.c.l.b16 %v285
    %v549 = vunpack.c.l.b16 %v286
    %v550 = vunpack.c.l.b16 %v287
    %v551 = vunpack.c.l.b16 %v288
    %v552 = vunpack.c.l.b16 %v289
    %v553 = vunpack.c.l.b16 %v290
    %v554 = vunpack.c.l.b16 %v291
    %v555 = vunpack.c.l.b16 %v292
    %v556 = vunpack.c.l.b16 %v293
    %v557 = vunpack.c.l.b16 %v294
    %v558 = vunpack.c.l.b16 %v295
    %v559 = vunpack.c.l.b16 %v296
    %v560 = vunpack.c.l.b16 %v297
    %v561 = vunpack.c.l.b16 %v298
    %v562 = vunpack.c.l.b16 %v299
    %v563 = vunpack.c.l.b16 %v300
    %v564 = vunpack.c.l.b16 %v301
    %v565 = vunpack.c.l.b16 %v302
    %v566 = vunpack.c.l.b16 %v303
    %v567 = vunpack.c.l.b16 %v304
    %v568 = vunpack.c.l.b16 %v305
    %v569 = vunpack.c.l.b16 %v306
    %v570 = vunpack.c.l.b16 %v307
    %v571 = vunpack.c.l.b16 %v308
    %v572 = vunpack.c.l.b16 %v309
    %v573 = vunpack.c.l.b16 %v310
    %v574 = vunpack.c.l.b16 %v311
    %v575 = vunpack.c.l.b16 %v312
    %v576 = vunpack.c.l.b16 %v313
    %v577 = vunpack.c.l.b16 %v314
    %v578 = vpack.c.b16 %v451, %v450
    %v579 = vpack.c.b16 %v453, %v452
    %v580 = vpack.c.b16 %v455, %v454
    %v581 = vpack.c.b16 %v457, %v456
    %v582 = vpack.c.b16 %v459, %v458
    %v583 = vpack.c.b16 %v461, %v460
    %v584 = vpack.c.b16 %v463, %v462
    %v585 = vpack.c.b16 %v465, %v464
    %v586 = vpack.c.b16 %v467, %v466
    %v587 = vpack.c.b16 %v469, %v468
    %v588 = vpack.c.b16 %v471, %v470
    %v589 = vpack.c.b16 %v473, %v472
    %v590 = vpack.c.b16 %v475, %v474
    %v591 = vpack.c.b16 %v477, %v476
    %v592 = vpack.c.b16 %v479, %v478
    %v593 = vpack.c.b16 %v481, %v480
    %v594 = vpack.c.b16 %v483, %v482
    %v595 = vpack.c.b16 %v485, %v484
    %v596 = vpack.c.b16 %v487, %v486
    %v597 = vpack.c.b16 %v489, %v488
    %v598 = vpack.c.b16 %v491, %v490
    %v599 = vpack.c.b16 %v493, %v492
    %v600 = vpack.c.b16 %v495, %v494
    %v601 = vpack.c.b16 %v497, %v496
    %v602 = vpack.c.b16 %v499, %v498
    %v603 = vpack.c.b16 %v501, %v500
    %v604 = vpack.c.b16 %v503, %v502
    %v605 = vpack.c.b16 %v505, %v504
    %v606 = vpack.c.b16 %v507, %v506
    %v607 = vpack.c.b16 %v509, %v508
    %v608 = vpack.c.b16 %v511, %v510
    %v609 = vpack.c.b16 %v513, %v512
    %v610 = vpack.c.b16 %v515, %v514
    %v611 = vpack.c.b16 %v517, %v516
    %v612 = vpack.c.b16 %v519, %v518
    %v613 = vpack.c.b16 %v521, %v520
    %v614 = vpack.c.b16 %v523, %v522
    %v615 = vpack.c.b16 %v525, %v524
    %v616 = vpack.c.b16 %v527, %v526
    %v617 = vpack.c.b16 %v529, %v528
    %v618 = vpack.c.b16 %v531, %v530
    %v619 = vpack.c.b16 %v533, %v532
    %v620 = vpack.c.b16 %v535, %v534
    %v621 = vpack.c.b16 %v537, %v536
    %v622 = vpack.c.b16 %v539, %v538
    %v623 = vpack.c.b16 %v541, %v540
    %v624 = vpack.c.b16 %v543, %v542
    %v625 = vpack.c.b16 %v545, %v544
    %v626 = vpack.c.b16 %v547, %v546
    %v627 = vpack.c.b16 %v549, %v548
    %v628 = vpack.c.b16 %v551, %v550
    %v629 = vpack.c.b16 %v553, %v552
    %v630 = vpack.c.b16 %v555, %v554
    %v631 = vpack.c.b16 %v557, %v556
    %v632 = vpack.c.b16 %v559, %v558
    %v633 = vpack.c.b16 %v561, %v560
    %v634 = vpack.c.b16 %v563, %v562
    %v635 = vpack.c.b16 %v565, %v564
    %v636 = vpack.c.b16 %v567, %v566
    %v637 = vpack.c.b16 %v569, %v568
    %v638 = vpack.c.b16 %v571, %v570
    %v639 = vpack.c.b16 %v573, %v572
    %v640 = vpack.c.b16 %v575, %v574
    %v641 = vpack.c.b16 %v577, %v576
    %706 = vmatprep.subr.bf16.mxu0 0
    %707 = vmatpush1.bf16.msra.mxu0 %v585
    %708 = vmatprep.subr.bf16.mxu0 0
    %709 = vmatpush1.bf16.msra.mxu0 %v584
    %710 = vmatprep.subr.bf16.mxu0 0
    %711 = vmatpush1.bf16.msra.mxu0 %v583
    %712 = vmatprep.subr.bf16.mxu0 0
    %713 = vmatpush1.bf16.msra.mxu0 %v582
    %714 = vmatprep.subr.bf16.mxu0 0
    %715 = vmatpush1.bf16.msra.mxu0 %v581
    %716 = vmatprep.subr.bf16.mxu0 0
    %717 = vmatpush1.bf16.msra.mxu0 %v580
    %718 = vmatprep.subr.bf16.mxu0 0
    %719 = vmatpush1.bf16.msra.mxu0 %v579
    %720 = vmatprep.subr.bf16.mxu0 0
    %721 = vmatpush1.bf16.msra.mxu0 %v578
    %722 = vmatprep.subr.bf16.mxu0 0
    %723 = vmatpush2.bf16.msra.mxu0 %v593
    %724 = vmatprep.subr.bf16.mxu0 0
    %725 = vmatpush2.bf16.msra.mxu0 %v592
    %726 = vmatprep.subr.bf16.mxu0 0
    %727 = vmatpush2.bf16.msra.mxu0 %v591
    %728 = vmatprep.subr.bf16.mxu0 0
    %729 = vmatpush2.bf16.msra.mxu0 %v590
    %730 = vmatprep.subr.bf16.mxu0 0
    %731 = vmatpush2.bf16.msra.mxu0 %v589
    %732 = vmatprep.subr.bf16.mxu0 0
    %733 = vmatpush2.bf16.msra.mxu0 %v588
    %734 = vmatprep.subr.bf16.mxu0 0
    %735 = vmatpush2.bf16.msra.mxu0 %v587
    %736 = vmatprep.subr.bf16.mxu0 0
    %737 = vmatpush2.bf16.msra.mxu0 %v586
    %738 = vmatprep.mubr.bf16.mxu0 %v180
    %739 = vmatmul.mubr.bf16.gmra.mxu0 %v179
    %v740 = vpop.f32.mrf.mxu0
    %v741 = vadd.f32 %v320, %v740
    %v742 = vpop.f32.mrf.mxu0
    %v743 = vpop.f32.mrf.mxu0
    %v744 = vpop.f32.mrf.mxu0
    %745 = vdwg.mxu0
    %746 = vmatprep.subr.bf16.mxu0 0
    %747 = vmatpush1.bf16.msra.mxu0 %v601
    %748 = vmatprep.subr.bf16.mxu0 0
    %749 = vmatpush1.bf16.msra.mxu0 %v600
    %750 = vmatprep.subr.bf16.mxu0 0
    %751 = vmatpush1.bf16.msra.mxu0 %v599
    %752 = vmatprep.subr.bf16.mxu0 0
    %753 = vmatpush1.bf16.msra.mxu0 %v598
    %754 = vmatprep.subr.bf16.mxu0 0
    %755 = vmatpush1.bf16.msra.mxu0 %v597
    %756 = vmatprep.subr.bf16.mxu0 0
    %757 = vmatpush1.bf16.msra.mxu0 %v596
    %758 = vmatprep.subr.bf16.mxu0 0
    %759 = vmatpush1.bf16.msra.mxu0 %v595
    %760 = vmatprep.subr.bf16.mxu0 0
    %761 = vmatpush1.bf16.msra.mxu0 %v594
    %762 = vmatprep.subr.bf16.mxu0 0
    %763 = vmatpush2.bf16.msra.mxu0 %v609
    %764 = vmatprep.subr.bf16.mxu0 0
    %765 = vmatpush2.bf16.msra.mxu0 %v608
    %766 = vmatprep.subr.bf16.mxu0 0
    %767 = vmatpush2.bf16.msra.mxu0 %v607
    %768 = vmatprep.subr.bf16.mxu0 0
    %769 = vmatpush2.bf16.msra.mxu0 %v606
    %770 = vmatprep.subr.bf16.mxu0 0
    %771 = vmatpush2.bf16.msra.mxu0 %v605
    %772 = vmatprep.subr.bf16.mxu0 0
    %773 = vmatpush2.bf16.msra.mxu0 %v604
    %774 = vmatprep.subr.bf16.mxu0 0
    %775 = vmatpush2.bf16.msra.mxu0 %v603
    %776 = vmatprep.subr.bf16.mxu0 0
    %777 = vmatpush2.bf16.msra.mxu0 %v602
    %778 = vmatprep.mubr.bf16.mxu0 %v182
    %779 = vmatmul.mubr.bf16.gmra.mxu0 %v181
    %v780 = vpop.f32.mrf.mxu0
    %v781 = vadd.f32 %v741, %v780
    %v782 = vpop.f32.mrf.mxu0
    %v783 = vpop.f32.mrf.mxu0
    %v784 = vpop.f32.mrf.mxu0
    %785 = vdwg.mxu0
    %786 = vmatprep.subr.bf16.mxu0 0
    %787 = vmatpush1.bf16.msra.mxu0 %v617
    %788 = vmatprep.subr.bf16.mxu0 0
    %789 = vmatpush1.bf16.msra.mxu0 %v616
    %790 = vmatprep.subr.bf16.mxu0 0
    %791 = vmatpush1.bf16.msra.mxu0 %v615
    %792 = vmatprep.subr.bf16.mxu0 0
    %793 = vmatpush1.bf16.msra.mxu0 %v614
    %794 = vmatprep.subr.bf16.mxu0 0
    %795 = vmatpush1.bf16.msra.mxu0 %v613
    %796 = vmatprep.subr.bf16.mxu0 0
    %797 = vmatpush1.bf16.msra.mxu0 %v612
    %798 = vmatprep.subr.bf16.mxu0 0
    %799 = vmatpush1.bf16.msra.mxu0 %v611
    %800 = vmatprep.subr.bf16.mxu0 0
    %801 = vmatpush1.bf16.msra.mxu0 %v610
    %802 = vmatprep.subr.bf16.mxu0 0
    %803 = vmatpush2.bf16.msra.mxu0 %v625
    %804 = vmatprep.subr.bf16.mxu0 0
    %805 = vmatpush2.bf16.msra.mxu0 %v624
    %806 = vmatprep.subr.bf16.mxu0 0
    %807 = vmatpush2.bf16.msra.mxu0 %v623
    %808 = vmatprep.subr.bf16.mxu0 0
    %809 = vmatpush2.bf16.msra.mxu0 %v622
    %810 = vmatprep.subr.bf16.mxu0 0
    %811 = vmatpush2.bf16.msra.mxu0 %v621
    %812 = vmatprep.subr.bf16.mxu0 0
    %813 = vmatpush2.bf16.msra.mxu0 %v620
    %814 = vmatprep.subr.bf16.mxu0 0
    %815 = vmatpush2.bf16.msra.mxu0 %v619
    %816 = vmatprep.subr.bf16.mxu0 0
    %817 = vmatpush2.bf16.msra.mxu0 %v618
    %818 = vmatprep.mubr.bf16.mxu0 %v184
    %819 = vmatmul.mubr.bf16.gmra.mxu0 %v183
    %v820 = vpop.f32.mrf.mxu0
    %v821 = vadd.f32 %v781, %v820
    %v822 = vpop.f32.mrf.mxu0
    %v823 = vpop.f32.mrf.mxu0
    %v824 = vpop.f32.mrf.mxu0
    %825 = vdwg.mxu0
    %826 = vmatprep.subr.bf16.mxu0 0
    %827 = vmatpush1.bf16.msra.mxu0 %v633
    %828 = vmatprep.subr.bf16.mxu0 0
    %829 = vmatpush1.bf16.msra.mxu0 %v632
    %830 = vmatprep.subr.bf16.mxu0 0
    %831 = vmatpush1.bf16.msra.mxu0 %v631
    %832 = vmatprep.subr.bf16.mxu0 0
    %833 = vmatpush1.bf16.msra.mxu0 %v630
    %834 = vmatprep.subr.bf16.mxu0 0
    %835 = vmatpush1.bf16.msra.mxu0 %v629
    %836 = vmatprep.subr.bf16.mxu0 0
    %837 = vmatpush1.bf16.msra.mxu0 %v628
    %838 = vmatprep.subr.bf16.mxu0 0
    %839 = vmatpush1.bf16.msra.mxu0 %v627
    %840 = vmatprep.subr.bf16.mxu0 0
    %841 = vmatpush1.bf16.msra.mxu0 %v626
    %842 = vmatprep.subr.bf16.mxu0 0
    %843 = vmatpush2.bf16.msra.mxu0 %v641
    %844 = vmatprep.subr.bf16.mxu0 0
    %845 = vmatpush2.bf16.msra.mxu0 %v640
    %846 = vmatprep.subr.bf16.mxu0 0
    %847 = vmatpush2.bf16.msra.mxu0 %v639
    %848 = vmatprep.subr.bf16.mxu0 0
    %849 = vmatpush2.bf16.msra.mxu0 %v638
    %850 = vmatprep.subr.bf16.mxu0 0
    %851 = vmatpush2.bf16.msra.mxu0 %v637
    %852 = vmatprep.subr.bf16.mxu0 0
    %853 = vmatpush2.bf16.msra.mxu0 %v636
    %854 = vmatprep.subr.bf16.mxu0 0
    %855 = vmatpush2.bf16.msra.mxu0 %v635
    %856 = vmatprep.subr.bf16.mxu0 0
    %857 = vmatpush2.bf16.msra.mxu0 %v634
    %858 = vmatprep.mubr.bf16.mxu0 %v186
    %859 = vmatmul.mubr.bf16.gmra.mxu0 %v185
    %v860 = vpop.f32.mrf.mxu0
    %v861 = vadd.f32 %v821, %v860
    %v862 = vpop.f32.mrf.mxu0
    %v863 = vpop.f32.mrf.mxu0
    %v864 = vpop.f32.mrf.mxu0
    %865 = vdwg.mxu0
    %vm866 = vcmp.gt.f32.partialorder %v861, 0.0
    %v867 = vmul.f32 %v861, 0.2
    %v868 = vsel %vm866, %v861, %v867
    %v869 = vpack.c.bf16 %v868, %v868
    %v870 = vld [vmem:[#allocation7] sm:$0xf]
    %v871 = vld [vmem:[#allocation7 + $0x4] sm:$0xf]
    %v872 = vld [vmem:[#allocation7 + $0x8] sm:$0xf]
    %v873 = vld [vmem:[#allocation7 + $0xc] sm:$0xf]
    %v874 = vld [vmem:[#allocation7 + $0x10] sm:$0xf]
    %v875 = vld [vmem:[#allocation7 + $0x14] sm:$0xf]
    %v876 = vld [vmem:[#allocation7 + $0x18] sm:$0xf]
    %v877 = vld [vmem:[#allocation7 + $0x1c] sm:$0xf]
    %v878 = vld [vmem:[#allocation7 + $0x20] sm:$0xf]
    %v879 = vld [vmem:[#allocation7 + $0x24] sm:$0xf]
    %v880 = vld [vmem:[#allocation7 + $0x28] sm:$0xf]
    %v881 = vld [vmem:[#allocation7 + $0x2c] sm:$0xf]
    %v882 = vld [vmem:[#allocation7 + $0x30] sm:$0xf]
    %v883 = vld [vmem:[#allocation7 + $0x34] sm:$0xf]
    %v884 = vld [vmem:[#allocation7 + $0x38] sm:$0xf]
    %v885 = vld [vmem:[#allocation7 + $0x3c] sm:$0xf]
    %v886 = vld [vmem:[%s4] sm:$0x1]
    %v888 = vlaneseq
    %v889 = vshrl.u32 %v888, 7
    %v890 = vsub.s32 0, %v889
    %v891 = vrot.slane %v886, %v890
    %v909 = vunpack.c.l.b16 %v870
    %v910 = vunpack.c.l.b16 %v871
    %v911 = vunpack.c.l.b16 %v872
    %v912 = vunpack.c.l.b16 %v873
    %v913 = vunpack.c.l.b16 %v874
    %v914 = vunpack.c.l.b16 %v875
    %v915 = vunpack.c.l.b16 %v876
    %v916 = vunpack.c.l.b16 %v877
    %v917 = vunpack.c.l.b16 %v878
    %v918 = vunpack.c.l.b16 %v879
    %v919 = vunpack.c.l.b16 %v880
    %v920 = vunpack.c.l.b16 %v881
    %v921 = vunpack.c.l.b16 %v882
    %v922 = vunpack.c.l.b16 %v883
    %v923 = vunpack.c.l.b16 %v884
    %v924 = vunpack.c.l.b16 %v885
    %v925 = vpack.c.b16 %v910, %v909
    %v926 = vpack.c.b16 %v912, %v911
    %v927 = vpack.c.b16 %v914, %v913
    %v928 = vpack.c.b16 %v916, %v915
    %v929 = vpack.c.b16 %v918, %v917
    %v930 = vpack.c.b16 %v920, %v919
    %v931 = vpack.c.b16 %v922, %v921
    %v932 = vpack.c.b16 %v924, %v923
    %941 = vmatprep.subr.bf16.mxu0 0
    %942 = vmatpush1.bf16.msra.mxu0 %v932
    %943 = vmatprep.subr.bf16.mxu0 0
    %944 = vmatpush1.bf16.msra.mxu0 %v931
    %945 = vmatprep.subr.bf16.mxu0 0
    %946 = vmatpush1.bf16.msra.mxu0 %v930
    %947 = vmatprep.subr.bf16.mxu0 0
    %948 = vmatpush1.bf16.msra.mxu0 %v929
    %949 = vmatprep.subr.bf16.mxu0 0
    %950 = vmatpush1.bf16.msra.mxu0 %v928
    %951 = vmatprep.subr.bf16.mxu0 0
    %952 = vmatpush1.bf16.msra.mxu0 %v927
    %953 = vmatprep.subr.bf16.mxu0 0
    %954 = vmatpush1.bf16.msra.mxu0 %v926
    %955 = vmatprep.subr.bf16.mxu0 0
    %956 = vmatpush1.bf16.msra.mxu0 %v925
    %957 = vmatprep.subr.bf16.mxu0 0
    %958 = vmatpush2.bf16.msra.mxu0 0
    %959 = vmatprep.subr.bf16.mxu0 0
    %960 = vmatpush2.bf16.msra.mxu0 0
    %961 = vmatprep.subr.bf16.mxu0 0
    %962 = vmatpush2.bf16.msra.mxu0 0
    %963 = vmatprep.subr.bf16.mxu0 0
    %964 = vmatpush2.bf16.msra.mxu0 0
    %965 = vmatprep.subr.bf16.mxu0 0
    %966 = vmatpush2.bf16.msra.mxu0 0
    %967 = vmatprep.subr.bf16.mxu0 0
    %968 = vmatpush2.bf16.msra.mxu0 0
    %969 = vmatprep.subr.bf16.mxu0 0
    %970 = vmatpush2.bf16.msra.mxu0 0
    %971 = vmatprep.subr.bf16.mxu0 0
    %972 = vmatpush2.bf16.msra.mxu0 0
    %973 = vmatprep.mubr.bf16.mxu0 0
    %974 = vmatmul.mubr.bf16.gmra.mxu0 %v869
    %v975 = vpop.f32.mrf.mxu0
    %v976 = vadd.f32 %v891, %v975
    %v977 = vpop.f32.mrf.mxu0
    %v978 = vpop.f32.mrf.mxu0
    %v979 = vpop.f32.mrf.mxu0
    %980 = vdwg.mxu0
    %vm981 = vcmp.gt.f32.partialorder %v976, 0.0
    %v982 = vmul.f32 %v976, 0.2
    %v983 = vsel %vm981, %v976, %v982
    %v984 = vpack.c.bf16 %v983, %v983
    %v985 = vld [vmem:[#allocation8] sm:$0xf]
    %v986 = vld [vmem:[#allocation8 + $0x4] sm:$0xf]
    %v987 = vld [vmem:[#allocation8 + $0x8] sm:$0xf]
    %v988 = vld [vmem:[#allocation8 + $0xc] sm:$0xf]
    %v989 = vld [vmem:[#allocation8 + $0x10] sm:$0xf]
    %v990 = vld [vmem:[#allocation8 + $0x14] sm:$0xf]
    %v991 = vld [vmem:[#allocation8 + $0x18] sm:$0xf]
    %v992 = vld [vmem:[#allocation8 + $0x1c] sm:$0xf]
    %v993 = vld [vmem:[#allocation8 + $0x20] sm:$0xf]
    %v994 = vld [vmem:[#allocation8 + $0x24] sm:$0xf]
    %v995 = vld [vmem:[#allocation8 + $0x28] sm:$0xf]
    %v996 = vld [vmem:[#allocation8 + $0x2c] sm:$0xf]
    %v997 = vld [vmem:[#allocation8 + $0x30] sm:$0xf]
    %v998 = vld [vmem:[#allocation8 + $0x34] sm:$0xf]
    %v999 = vld [vmem:[#allocation8 + $0x38] sm:$0xf]
    %v1000 = vld [vmem:[#allocation8 + $0x3c] sm:$0xf]
    %v1001 = vld [vmem:[%s6] sm:$0x1]
    %v1003 = vlaneseq
    %v1004 = vshrl.u32 %v1003, 7
    %v1005 = vsub.s32 0, %v1004
    %v1006 = vrot.slane %v1001, %v1005
    %v1024 = vunpack.c.l.b16 %v985
    %v1025 = vunpack.c.l.b16 %v986
    %v1026 = vunpack.c.l.b16 %v987
    %v1027 = vunpack.c.l.b16 %v988
    %v1028 = vunpack.c.l.b16 %v989
    %v1029 = vunpack.c.l.b16 %v990
    %v1030 = vunpack.c.l.b16 %v991
    %v1031 = vunpack.c.l.b16 %v992
    %v1032 = vunpack.c.l.b16 %v993
    %v1033 = vunpack.c.l.b16 %v994
    %v1034 = vunpack.c.l.b16 %v995
    %v1035 = vunpack.c.l.b16 %v996
    %v1036 = vunpack.c.l.b16 %v997
    %v1037 = vunpack.c.l.b16 %v998
    %v1038 = vunpack.c.l.b16 %v999
    %v1039 = vunpack.c.l.b16 %v1000
    %v1040 = vpack.c.b16 %v1025, %v1024
    %v1041 = vpack.c.b16 %v1027, %v1026
    %v1042 = vpack.c.b16 %v1029, %v1028
    %v1043 = vpack.c.b16 %v1031, %v1030
    %v1044 = vpack.c.b16 %v1033, %v1032
    %v1045 = vpack.c.b16 %v1035, %v1034
    %v1046 = vpack.c.b16 %v1037, %v1036
    %v1047 = vpack.c.b16 %v1039, %v1038
    %1056 = vmatprep.subr.bf16.mxu0 0
    %1057 = vmatpush1.bf16.msra.mxu0 %v1047
    %1058 = vmatprep.subr.bf16.mxu0 0
    %1059 = vmatpush1.bf16.msra.mxu0 %v1046
    %1060 = vmatprep.subr.bf16.mxu0 0
    %1061 = vmatpush1.bf16.msra.mxu0 %v1045
    %1062 = vmatprep.subr.bf16.mxu0 0
    %1063 = vmatpush1.bf16.msra.mxu0 %v1044
    %1064 = vmatprep.subr.bf16.mxu0 0
    %1065 = vmatpush1.bf16.msra.mxu0 %v1043
    %1066 = vmatprep.subr.bf16.mxu0 0
    %1067 = vmatpush1.bf16.msra.mxu0 %v1042
    %1068 = vmatprep.subr.bf16.mxu0 0
    %1069 = vmatpush1.bf16.msra.mxu0 %v1041
    %1070 = vmatprep.subr.bf16.mxu0 0
    %1071 = vmatpush1.bf16.msra.mxu0 %v1040
    %1072 = vmatprep.subr.bf16.mxu0 0
    %1073 = vmatpush2.bf16.msra.mxu0 0
    %1074 = vmatprep.subr.bf16.mxu0 0
    %1075 = vmatpush2.bf16.msra.mxu0 0
    %1076 = vmatprep.subr.bf16.mxu0 0
    %1077 = vmatpush2.bf16.msra.mxu0 0
    %1078 = vmatprep.subr.bf16.mxu0 0
    %1079 = vmatpush2.bf16.msra.mxu0 0
    %1080 = vmatprep.subr.bf16.mxu0 0
    %1081 = vmatpush2.bf16.msra.mxu0 0
    %1082 = vmatprep.subr.bf16.mxu0 0
    %1083 = vmatpush2.bf16.msra.mxu0 0
    %1084 = vmatprep.subr.bf16.mxu0 0
    %1085 = vmatpush2.bf16.msra.mxu0 0
    %1086 = vmatprep.subr.bf16.mxu0 0
    %1087 = vmatpush2.bf16.msra.mxu0 0
    %1088 = vmatprep.mubr.bf16.mxu0 0
    %1089 = vmatmul.mubr.bf16.gmra.mxu0 %v984
    %v1090 = vpop.f32.mrf.mxu0
    %v1091 = vadd.f32 %v1006, %v1090
    %v1092 = vpop.f32.mrf.mxu0
    %v1093 = vpop.f32.mrf.mxu0
    %v1094 = vpop.f32.mrf.mxu0
    %1095 = vdwg.mxu0
    %vm1096 = vcmp.gt.f32.partialorder %v1091, 0.0
    %v1097 = vmul.f32 %v1091, 0.2
    %v1098 = vsel %vm1096, %v1091, %v1097
    %v1099 = vpack.c.bf16 %v1098, %v1098
    %v1102 = vunpack.c.l.s4 1966171168
    %v1103 = vunpack.c.0.s8 %v1102
    %v1104 = vlaneseq
    %v1105 = vshrl.u32 %v1104, 7
    %v1106 = vsub.s32 %v1103, %v1105
    %v1107 = vrot.slane %v1099, %v1106
    %v1108 = vcombine.high %v1107, %v1107
    %v1110 = vunpack.c.l.s4 1966171168
    %v1111 = vunpack.c.0.s8 %v1110
    %v1112 = vlaneseq
    %v1113 = vshrl.u32 %v1112, 7
    %v1114 = vsub.s32 %v1111, %v1113
    %v1115 = vrot.slane %v1107, %v1114
    %v1117 = vunpack.c.l.s4 1966171168
    %v1118 = vunpack.c.0.s8 %v1117
    %v1119 = vlaneseq
    %v1120 = vshrl.u32 %v1119, 7
    %v1121 = vsub.s32 %v1118, %v1120
    %v1122 = vrot.slane %v1108, %v1121
    %v1123 = vcombine.high %v1115, %v1115
    %v1124 = vcombine.high %v1122, %v1122
    %1129 = vst [vmem:[#allocation10] sm:$0x1] %v1115
    %1130 = vst [vmem:[#allocation10 + $0x1] sm:$0x1] %v1122
    %1131 = vst [vmem:[#allocation10 + $0x2] sm:$0x1] %v1123
    %1132 = vst [vmem:[#allocation10 + $0x3] sm:$0x1] %v1124
    // Predicated region
    $region46: #{tpu_custom_call.1} parent=1 // pred_check
      _
    $region47: #{tpu_custom_call.1} parent=1 // pred_check_branch
      %1134 = sbr.rel (0) target = $region49
    $region48: #{tpu_custom_call.1} parent=1 // pred_region
      %s1136 = ssub.s32 64, 16
      %1137 = vsyncadd [#allocation4], %s1136
      %s1138 = sshll.u32 [#allocation10], 4
      %s1139 = int_to_ptr.vmem [resolvable:$true] %s1138
      %1144 = dma.vmem_to_hbm [thread:$0]  %s1139, 16, %s7, [#allocation4], 16, 16, 1
    $region49: #{tpu_custom_call.1} parent=1 // pred_fallthru
      _
    // Predicated region
    $region50: #{tpu_custom_call.1} parent=1 // pred_check
      _
    $region51: #{tpu_custom_call.1} parent=1 // pred_check_branch
      %1146 = sbr.rel (0) target = $region53
    $region52: #{tpu_custom_call.1} parent=1 // pred_region
      %1147 = dma.done [#allocation4], 64
    $region53: #{tpu_custom_call.1} parent=1 // pred_fallthru
      _
    %1148 = vsyncpa [#allocation3], 1
    %1149 = vsyncpa [#allocation6], 1
    %1150 = vsyncpa [#allocation9], 1
    %1151 = vsyncpa [#allocation4], 1

</llo_original>
